<compile_context>
chip_gen: v7x
topology: tpu7x:2x2x1
jax: 0.10.0
libtpu: 0.0.40
codegen_flags: <defaults>
</compile_context>

<pallas_src>
import jax
import jax.numpy as jnp
from jax import lax
from jax.experimental import pallas as pl
from jax.experimental.pallas import tpu as pltpu


def _round_up(x: int, m: int) -> int:
    return (x + m - 1) // m * m


def _make_positional_encoding(d_model: int, max_len: int) -> jnp.ndarray:
    """Standard sinusoidal PE table, shape (max_len, d_model), float32."""
    pos = jnp.arange(max_len, dtype=jnp.float32)[:, None]          # (max_len, 1)
    two_i = jnp.arange(0, d_model, 2, dtype=jnp.float32)           # (d_model//2,)
    div = jnp.power(10000.0, two_i / d_model)                      # (d_model//2,)
    angles = pos / div                                             # (max_len, d_model//2)
    pe = jnp.zeros((max_len, d_model), dtype=jnp.float32)
    pe = pe.at[:, 0::2].set(jnp.sin(angles))
    pe = pe.at[:, 1::2].set(jnp.cos(angles))
    return pe


def _gather_embed_kernel(tok_sref,      # SMEM (scalar prefetch): (B * S_pad,) int32
                         emb_hbm,       # HBM (pl.ANY): (V, D) f32, never VMEM-resident
                         pos_ref,       # VMEM: (TS, D) f32 — PE tile for this seq tile
                         out_ref,       # VMEM: (1, TS, D) f32 output block
                         gather_buf,    # VMEM scratch: (TS, D) f32 gathered rows
                         copy_sem):     # DMA semaphore (shared; all copies same size)
    b = pl.program_id(0)
    s = pl.program_id(1)
    num_seq_tiles = pl.num_programs(1)

    TS, D = gather_buf.shape
    V = emb_hbm.shape[0]

    # Flat index of the first token of this (batch, seq-tile) block.
    base = (b * num_seq_tiles + s) * TS

    # Issue TS row-gather DMAs (HBM -> VMEM). The copy engine overlaps them.
    def issue_row(j, carry):
        tid = tok_sref[base + j]
        tid = jnp.clip(tid, 0, V - 1)            # guard out-of-range token ids
        pltpu.make_async_copy(
            emb_hbm.at[pl.ds(tid, 1), :],
            gather_buf.at[pl.ds(j, 1), :],
            copy_sem,
        ).start()
        return carry

    lax.fori_loop(0, TS, issue_row, 0)

    # Drain: all row copies are the same size, so TS waits on the shared
    # semaphore guarantee the whole tile has landed.
    def wait_row(j, carry):
        pltpu.make_async_copy(
            emb_hbm.at[pl.ds(0, 1), :],
            gather_buf.at[pl.ds(0, 1), :],
            copy_sem,
        ).wait()
        return carry

    lax.fori_loop(0, TS, wait_row, 0)

    # One vectorized add + one full (TS, D) unmasked store.
    out_ref[0] = gather_buf[...] + pos_ref[...]


def transformer_embedding(tokens: jnp.ndarray,
                          emb_table: jnp.ndarray,
                          pe_table: jnp.ndarray,
                          *,
                          seq_tile: int = 256) -> jnp.ndarray:
    """tokens: (B, S) int; emb_table: (V, D) f32; pe_table: (max_len, D) f32.

    Returns (B, S, D) f32 = emb_table[tokens] + pe_table[:S] (broadcast over B).
    """
    B, S = tokens.shape
    V, D = emb_table.shape
    assert S <= pe_table.shape[0], "sequence longer than positional table"

    # Sequence tile: multiple of 8 sublanes, capped so blocks stay modest.
    TS = min(_round_up(S, 8), seq_tile)
    S_pad = _round_up(S, TS)

    # Pad tokens / PE to the tiled sequence length; extra rows are sliced off.
    tok_pad = jnp.zeros((B, S_pad), dtype=jnp.int32)
    tok_pad = tok_pad.at[:, :S].set(tokens.astype(jnp.int32))
    tok_flat = tok_pad.reshape(B * S_pad)

    pos = pe_table[:S].astype(jnp.float32)
    if S_pad != S:
        pos = jnp.pad(pos, ((0, S_pad - S), (0, 0)))

    grid = (B, S_pad // TS)

    out = pl.pallas_call(
        _gather_embed_kernel,
        out_shape=jax.ShapeDtypeStruct((B, S_pad, D), jnp.float32),
        grid_spec=pltpu.PrefetchScalarGridSpec(
            num_scalar_prefetch=1,                    # token ids -> SMEM
            grid=grid,
            in_specs=[
                # Embedding table stays in HBM; rows are DMA'd on demand.
                pl.BlockSpec(memory_space=pl.ANY),
                # Only the (TS, D) PE tile for this sequence tile is resident.
                pl.BlockSpec((TS, D), lambda b, s, tok: (s, 0)),
            ],
            out_specs=pl.BlockSpec((1, TS, D), lambda b, s, tok: (b, s, 0)),
            scratch_shapes=[
                pltpu.VMEM((TS, D), jnp.float32),      # gathered rows
                pltpu.SemaphoreType.DMA(()),           # shared DMA semaphore
            ],
        ),
        compiler_params=pltpu.CompilerParams(
            dimension_semantics=("parallel", "parallel"),
            vmem_limit_bytes=32 * 1024 * 1024,
        ),
    )(tok_flat, emb_table.astype(jnp.float32), pos)

    return out[:, :S, :]


if __name__ == "__main__":
    # Small shapes consistent with the module's forward.
    vocab_size = 64
    d_model = 128     # lane-aligned feature dim
    max_len = 16
    batch = 2
    seq_len = 8

    key = jax.random.PRNGKey(0)
    k_tok, k_emb = jax.random.split(key)

    # nn.Embedding default init: N(0, 1)
    emb_table = jax.random.normal(k_emb, (vocab_size, d_model), dtype=jnp.float32)
    pe_table = _make_positional_encoding(d_model, max_len)

    tokens = jax.random.randint(k_tok, (batch, seq_len), 0, vocab_size,
                                dtype=jnp.int32)

    out = transformer_embedding(tokens, emb_table, pe_table)
    out = jax.block_until_ready(out)

    # Pure-JAX reference check.
    ref = emb_table[tokens] + pe_table[:seq_len][None, :, :]
    assert out.shape == (batch, seq_len, d_model)
    assert jnp.allclose(out, ref, atol=1e-6), "mismatch vs reference"

    print("KERNEL_OK")
</pallas_src>

<mosaic_0001>
module attributes {stable_mosaic.version = 11 : i64} {
  func.func @_gather_embed_kernel(%arg0: i32, %arg1: i32, %arg2: memref<16xi32, #tpu.memory_space<smem>>, %arg3: memref<64x128xf32, #tpu.memory_space<any>>, %arg4: memref<8x128xf32, #tpu.memory_space<vmem>>, %arg5: memref<1x8x128xf32, #tpu.memory_space<vmem>>, %arg6: memref<8x128xf32, #tpu.memory_space<vmem>>, %arg7: memref<!tpu.dma_semaphore, #tpu.memory_space<semaphore_mem>>) attributes {dimension_semantics = [#tpu.dimension_semantics<parallel>, #tpu.dimension_semantics<parallel>], iteration_bounds = array<i64: 2, 1>, scalar_prefetch = 1 : i64, scratch_operands = 2 : i64, tpu.core_type = #tpu.core_type<tc>, window_params = [{}, {transform_indices = @transform_1, window_bounds = array<i64: 8, 128>}, {transform_indices = @transform_2, window_bounds = array<i64: 1, 8, 128>}]} {
    %c1_i32 = arith.constant 1 : i32
    %0 = arith.muli %arg0, %c1_i32 : i32
    %1 = arith.addi %0, %arg1 : i32
    %c8_i32 = arith.constant 8 : i32
    %2 = arith.muli %1, %c8_i32 : i32
    %c0_i32 = arith.constant 0 : i32
    %c8_i32_0 = arith.constant 8 : i32
    %3 = arith.addi %c0_i32, %c8_i32_0 : i32
    %c1_i32_1 = arith.constant 1 : i32
    scf.for %arg8 = %c0_i32 to %3 step %c1_i32_1  : i32 {
      %11 = arith.addi %2, %arg8 : i32
      %12 = arith.index_cast %11 : i32 to index
      %13 = memref.load %arg2[%12] : memref<16xi32, #tpu.memory_space<smem>>
      %c0_i32_12 = arith.constant 0 : i32
      %c63_i32 = arith.constant 63 : i32
      %14 = arith.maxsi %c0_i32_12, %13 : i32
      %15 = arith.minsi %c63_i32, %14 : i32
      %c0_i32_13 = arith.constant 0 : i32
      %16 = tpu.memref_slice %arg3[%15, %c0_i32_13] : memref<64x128xf32, #tpu.memory_space<any>> -> memref<1x128xf32, #tpu.memory_space<any>>
      %c0_i32_14 = arith.constant 0 : i32
      %17 = tpu.memref_slice %arg6[%arg8, %c0_i32_14] : memref<8x128xf32, #tpu.memory_space<vmem>> -> memref<1x128xf32, #tpu.memory_space<vmem>>
      tpu.enqueue_dma source(%16 : memref<1x128xf32, #tpu.memory_space<any>>) target(%17 : memref<1x128xf32, #tpu.memory_space<vmem>>) target_semaphore(%arg7 : memref<!tpu.dma_semaphore, #tpu.memory_space<semaphore_mem>>)
    }
    %c8_i32_2 = arith.constant 8 : i32
    %c0_i32_3 = arith.constant 0 : i32
    %c8_i32_4 = arith.constant 8 : i32
    %4 = arith.addi %c0_i32_3, %c8_i32_4 : i32
    %c1_i32_5 = arith.constant 1 : i32
    scf.for %arg8 = %c0_i32_3 to %4 step %c1_i32_5  : i32 {
      %c0_i32_12 = arith.constant 0 : i32
      %c0_i32_13 = arith.constant 0 : i32
      %11 = tpu.memref_slice %arg3[%c0_i32_12, %c0_i32_13] : memref<64x128xf32, #tpu.memory_space<any>> -> memref<1x128xf32, #tpu.memory_space<any>>
      %c0_i32_14 = arith.constant 0 : i32
      %c0_i32_15 = arith.constant 0 : i32
      %12 = tpu.memref_slice %arg6[%c0_i32_14, %c0_i32_15] : memref<8x128xf32, #tpu.memory_space<vmem>> -> memref<1x128xf32, #tpu.memory_space<vmem>>
      tpu.wait_dma2 semaphore(%arg7 : memref<!tpu.dma_semaphore, #tpu.memory_space<semaphore_mem>>) src(%11 : memref<1x128xf32, #tpu.memory_space<any>>) dst(%12 : memref<1x128xf32, #tpu.memory_space<vmem>>)
    }
    %c0 = arith.constant 0 : index
    %c0_6 = arith.constant 0 : index
    %5 = vector.load %arg6[%c0, %c0_6] : memref<8x128xf32, #tpu.memory_space<vmem>>, vector<8x128xf32>
    %c0_7 = arith.constant 0 : index
    %c0_8 = arith.constant 0 : index
    %6 = vector.load %arg4[%c0_7, %c0_8] : memref<8x128xf32, #tpu.memory_space<vmem>>, vector<8x128xf32>
    %7 = arith.addf %5, %6 : vector<8x128xf32>
    %c0_9 = arith.constant 0 : index
    %c0_10 = arith.constant 0 : index
    %c0_11 = arith.constant 0 : index
    %8 = vector.load %arg5[%c0_9, %c0_10, %c0_11] : memref<1x8x128xf32, #tpu.memory_space<vmem>>, vector<1x8x128xf32>
    %9 = vector.shape_cast %8 : vector<1x8x128xf32> to vector<8x128xf32>
    %10 = vector.shape_cast %7 : vector<8x128xf32> to vector<1x8x128xf32>
    tpu.vector_store %arg5[%c0_9, %c0_10, %c0_11], %10 {strides = array<i32>} : memref<1x8x128xf32, #tpu.memory_space<vmem>>, vector<1x8x128xf32>,
    return
  }
  func.func @transform_1(%arg0: i32, %arg1: i32, %arg2: memref<16xi32, #tpu.memory_space<smem>>) -> (i32, i32) {
    %c0_i32 = arith.constant 0 : i32
    %c0_i32_0 = arith.constant 0 : i32
    return %arg1, %c0_i32 : i32, i32
  }
  func.func @transform_2(%arg0: i32, %arg1: i32, %arg2: memref<16xi32, #tpu.memory_space<smem>>) -> (i32, i32, i32) {
    %c0_i32 = arith.constant 0 : i32
    %c0_i32_0 = arith.constant 0 : i32
    return %arg0, %arg1, %c0_i32 : i32, i32, i32
  }
}

</mosaic_0001>

<llo_original>
// kernel: tpu_custom_call.1
$region0: #{tpu_custom_call.1}
  #allocation0 [shape = 'u32[]', space=smem, size = 0x4, offset = 0x4, fixed_abs, tag = 'smem constant byte address 0x4 - core index']
  #allocation1 [shape = 'u32[144,128]{1,0:T(1,128)}', space=vmem, size = 0x12000, scoped, tag = 'internal scratch']
  #allocation2 [shape = 'f32[8,128]{1,0:T(8,128)}', space=vmem, size = 0x1000, scoped, tag = 'scratch operand']
  #allocation3 [shape = 's32[1]{0}', space=sflag, size = 0x4, scoped, tag = 'scratch operand']
  #allocation4 [shape = 's32[1]{0}', space=sflag, size = 0x4, scoped, tag = 'scoped memory for tpu_custom_call.1']
  #allocation5 [shape = 'u8[512]{0}', space=smem, size = 0x200, scoped, tag = 'prefetched SMEM operand 0']
  #allocation10 [shape = 's32[]', space=sflag, size = 0x4, offset = 0, fixed_abs, tag = 'sflag constant byte address 0x0 - dummy sync flag']
  #allocation11 [shape = 's32[]', space=sflag, size = 0x4, offset = 0, fixed_abs, tag = 'sflag constant byte address 0x0 - dummy sync flag']
  #allocation12 [shape = 'u32[]', space=smem, size = 0x4, offset = 0x44, fixed_abs, tag = 'smem constant byte address 0x44 - assertion arg 0']
  #allocation13 [shape = 'u32[]', space=smem, size = 0x4, offset = 0x48, fixed_abs, tag = 'smem constant byte address 0x48 - assertion arg 1']
  %s0 = inlined_call_operand.hbm [shape: s32[16], index: 0, kind: input, shape index: {}]
  %s1 = inlined_call_operand.hbm [shape: f32[64,128], index: 1, kind: input, shape index: {}]
  %s2 = inlined_call_operand.hbm [shape: f32[8,128], index: 2, kind: input, shape index: {}]
  %s3 = inlined_call_operand.hbm [shape: f32[2,8,128], index: 3, kind: output, shape index: {}]
  %s4 = sld [smem:[#allocation0]]
  $region59: #{tpu_custom_call.1} parent=0
    _
  %s6 = ssub.s32 1, %s4
  %s7 = scalar_select 0, %s6, %s4
  %9 = dma.hbm_to_smem %s0, 16, [#allocation5], [#allocation4]
  %10 = dma.done [#allocation4], 16
  %11 = sfence
  $region1: #{tpu_custom_call.1} parent=0
    #allocation6 [shape = 'u8[4096]{0}', space=vmem, size = 0x1000, scoped, tag = 'input window, operand 2, single buffered']
    #allocation7 [shape = 's32[2]{0}', space=sflag, size = 0x8, scoped, tag = 'scoped memory for tpu_custom_call.1']
    #allocation8 [shape = 's32[2]{0}', space=sflag, size = 0x8, scoped, tag = 'scoped memory for tpu_custom_call.1']
    #allocation9 [shape = 'u8[8192]{0}', space=vmem, size = 0x2000, scoped, tag = 'output window, operand 0']
    %12 = vsyncpa [#allocation7], 0
    %13 = vsyncpa [#allocation8], 0
    %s14 = scalar_lea.sflag [#allocation8], 1
    %15 = vsyncpa %s14, 0
    loop: start=0, step=1, limit=4
    $region2: #{tpu_custom_call.1} parent=1 // loop_pre_header
      _
    $region3: #{tpu_custom_call.1} parent=1 // loop_header
      %s17 = sphi 0, %s21
      %p18 = scmp.ge.s32.totalorder %s17, 4
      %s24 = sphi 0, %s36
      %s25 = sphi 0, %s32
      %s26 = sphi 0, %s24
      %s27 = sphi 0, %s25
      %s28 = sphi 0, %s26
      %s29 = sphi 0, %s27
      %s39 = sphi 0, %s41
      %s42 = sphi 0, %s39
      %s43 = sphi 0, %s42
      %s59 = sphi 0, %s43
      %s67 = sphi 0, %s69
      %s70 = sphi 0, %s67
      %s71 = sphi 0, %s70
      %s87 = sphi 0, %s71
    $region4: #{tpu_custom_call.1} parent=1 // loop_header_branch
      %20 = sbr.rel (%p18) target = $region8
    $region5: #{tpu_custom_call.1} parent=1 // loop_body
      %s22 = ssub.s32 %s17, 1
      %s23 = ssub.s32 %s17, 2
      %s30 = sadd.s32 1, %s25
      %p31 = scmp.ge.s32.totalorder %s30, 1
      %s32 = scalar_select %p31, 0, %s30
      %s33 = sadd.s32 1, %s24
      %s34 = scalar_select %p31, %s33, %s24
      %p35 = scmp.ge.s32.totalorder %s34, 2
      %s36 = scalar_select %p35, 0, %s34
      %s37 = ssub.s32 %s25, %s32
      %p38 = scmp.eq.s32.totalorder %s37, 0
      %s40 = sadd.s32 %s39, 1
      %s41 = scalar_select %p38, %s39, %s40
      %p44 = pneg %p38
      %p45 = scmp.eq.s32.totalorder %s17, 1
      %p46 = por %p44, %p45
      %p47 = scmp.ne.s32.totalorder %s39, %s42
      %p48 = scmp.eq.s32.totalorder %s17, 0
      %p49 = por %p47, %p48
      %p50 = scmp.ne.s32.totalorder %s39, %s42
      %p51 = scmp.eq.s32.totalorder %s22, 1
      %p52 = por %p50, %p51
      %p53 = scmp.ne.s32.totalorder %s42, %s43
      %p54 = scmp.eq.s32.totalorder %s22, 0
      %p55 = por %p53, %p54
      %p56 = scmp.ne.s32.totalorder %s42, %s43
      %p57 = scmp.eq.s32.totalorder %s23, 1
      %p58 = por %p56, %p57
      %p60 = scmp.ne.s32.totalorder %s43, %s59
      %p61 = scmp.eq.s32.totalorder %s23, 0
      %p62 = por %p60, %p61
      %s63 = ssub.s32 %s24, %s36
      %s64 = ssub.s32 %s25, %s32
      %s65 = sor.u32 %s63, %s64
      %p66 = scmp.eq.s32.totalorder %s65, 0
      %s68 = sadd.s32 %s67, 1
      %s69 = scalar_select %p66, %s67, %s68
      %p72 = pneg %p66
      %p73 = scmp.eq.s32.totalorder %s17, 1
      %p74 = por %p72, %p73
      %p75 = scmp.ne.s32.totalorder %s67, %s70
      %p76 = scmp.eq.s32.totalorder %s17, 0
      %p77 = por %p75, %p76
      %p78 = scmp.ne.s32.totalorder %s67, %s70
      %p79 = scmp.eq.s32.totalorder %s22, 1
      %p80 = por %p78, %p79
      %p81 = scmp.ne.s32.totalorder %s70, %s71
      %p82 = scmp.eq.s32.totalorder %s22, 0
      %p83 = por %p81, %p82
      %p84 = scmp.ne.s32.totalorder %s70, %s71
      %p85 = scmp.eq.s32.totalorder %s23, 1
      %p86 = por %p84, %p85
      %p88 = scmp.ne.s32.totalorder %s71, %s87
      %p89 = scmp.eq.s32.totalorder %s23, 0
      %p90 = por %p88, %p89
      %p91 = scmp.le.s32.totalorder 1, %s17
      %p92 = scmp.lt.s32.totalorder %s17, 3
      %p93 = pnand %p91, %p92
      %p94 = pneg %p93
      // Predicated region
      $region9: #{tpu_custom_call.1} parent=5 // pred_check
        _
      $region10: #{tpu_custom_call.1} parent=5 // pred_check_branch
        %96 = sbr.rel (%p93) target = $region12
      $region11: #{tpu_custom_call.1} parent=5 // pred_region
        %s97 = ssub.s32 %s17, 1
        // Predicated region
        $region13: #{tpu_custom_call.1} parent=11 // pred_check
          %p98 = pneg %p55
        $region14: #{tpu_custom_call.1} parent=11 // pred_check_branch
          %100 = sbr.rel (%p98) target = $region16
        $region15: #{tpu_custom_call.1} parent=11 // pred_region
          %s102 = ssub.s32 128, 128
          %103 = vsyncadd [#allocation7], %s102
          %s104 = smul.addr %s27, 128
          %s105 = scalar_lea.hbm %s2, %s104
          %s107 = sshll.u32 [#allocation6], 4
          %s108 = int_to_ptr.vmem [resolvable:$true] %s107
          %110 = dma.hbm_to_vmem [thread:$0]  %s105, 128, %s108, [#allocation7]
        $region16: #{tpu_custom_call.1} parent=11 // pred_fallthru
          _
      $region12: #{tpu_custom_call.1} parent=5 // pred_fallthru
        _
      %p111 = scmp.lt.s32.totalorder %s17, 2
      // Predicated region
      $region17: #{tpu_custom_call.1} parent=5 // pred_check
        %p112 = pneg %p111
      $region18: #{tpu_custom_call.1} parent=5 // pred_check_branch
        %114 = sbr.rel (%p112) target = $region20
      $region19: #{tpu_custom_call.1} parent=5 // pred_region
        _
      $region20: #{tpu_custom_call.1} parent=5 // pred_fallthru
        _
      %p115 = scmp.le.s32.totalorder 1, %s17
      %p116 = scmp.lt.s32.totalorder %s17, 3
      %p117 = pnand %p115, %p116
      %p118 = pneg %p117
      // Predicated region
      $region21: #{tpu_custom_call.1} parent=5 // pred_check
        _
      $region22: #{tpu_custom_call.1} parent=5 // pred_check_branch
        %120 = sbr.rel (%p117) target = $region24
      $region23: #{tpu_custom_call.1} parent=5 // pred_region
        %s121 = ssub.s32 %s17, 1
        // Predicated region
        $region25: #{tpu_custom_call.1} parent=23 // pred_check
          %p122 = pneg %p55
        $region26: #{tpu_custom_call.1} parent=23 // pred_check_branch
          %124 = sbr.rel (%p122) target = $region28
        $region27: #{tpu_custom_call.1} parent=23 // pred_region
          %125 = dma.done [#allocation7], 128
        $region28: #{tpu_custom_call.1} parent=23 // pred_fallthru
          _
        %p126 = pneg %p55
        %p127 = pneg %p52
        %p128 = pneg %p83
        %p129 = pneg %p80
        %s130 = sand.u32 %s70, 1
        %s131 = scalar_lea.sflag [#allocation8], %s130
        %s132 = sand.u32 %s70, 1
        %s133 = smul.addr %s132, 8
        %s134 = scalar_lea.vmem [#allocation9], %s133
        %s135 = sadd.s32 %s26, %s27
        %s136 = smul.u32 %s135, 8
        loop: start=0, step=1, limit=8
        $region29: #{tpu_custom_call.1} parent=23 // loop_pre_header
          _
        $region30: #{tpu_custom_call.1} parent=23 // loop_header
          %s138 = sphi 0, %s142
          %p139 = scmp.ge.s32.totalorder %s138, 8
        $region31: #{tpu_custom_call.1} parent=23 // loop_header_branch
          %141 = sbr.rel (%p139) target = $region35
        $region32: #{tpu_custom_call.1} parent=23 // loop_body
          %s143 = sadd.s32 %s136, %s138
          %s144 = sld [smem:[#allocation5 + %s143]]
          %p145 = scmp.gt.s32.totalorder %s144, 0
          %s146 = scalar_select %p145, %s144, 0
          %p147 = scmp.lt.s32.totalorder %s146, 63
          %s148 = scalar_select %p147, %s146, 63
          %s149 = smul.addr %s148, 16
          %s150 = scalar_lea.hbm %s1, %s149
          %s151 = scalar_lea.vmem [#allocation2], %s138
          // Predicated region
          $region36: #{tpu_custom_call.1} parent=32 // pred_check
            _
          $region37: #{tpu_custom_call.1} parent=32 // pred_check_branch
            %153 = sbr.rel target = $region39
          $region38: #{tpu_custom_call.1} parent=32 // pred_region
            %154 = sst [smem:[#allocation12]] [#allocation11]
            %155 = sst [smem:[#allocation13]] [#allocation10]
          $region39: #{tpu_custom_call.1} parent=32 // pred_fallthru
            _
          %157 = shalt.err (0)
          %s159 = sshll.u32 %s151, 4
          %s160 = int_to_ptr.vmem [resolvable:$true] %s159
          %162 = dma.hbm_to_vmem [thread:$0]  %s150, 16, %s160, [#allocation3]
        $region33: #{tpu_custom_call.1} parent=23 // loop_footer
          %s142 = sadd.s32 1, %s138
        $region34: #{tpu_custom_call.1} parent=23 // loop_footer_branch
          %137 = sbr.rel target = $region30
        $region35: #{tpu_custom_call.1} parent=23 // loop_exit
          _
        loop: start=0, step=1, limit=8
        $region40: #{tpu_custom_call.1} parent=23 // loop_pre_header
          _
        $region41: #{tpu_custom_call.1} parent=23 // loop_header
          %s164 = sphi 0, %s168
          %p165 = scmp.ge.s32.totalorder %s164, 8
        $region42: #{tpu_custom_call.1} parent=23 // loop_header_branch
          %167 = sbr.rel (%p165) target = $region46
        $region43: #{tpu_custom_call.1} parent=23 // loop_body
          %s169 = smul.u32 1, 1
          %s170 = sshll.u32 %s169, 4
          %171 = dma.done [#allocation3], %s170
        $region44: #{tpu_custom_call.1} parent=23 // loop_footer
          %s168 = sadd.s32 1, %s164
        $region45: #{tpu_custom_call.1} parent=23 // loop_footer_branch
          %163 = sbr.rel target = $region41
        $region46: #{tpu_custom_call.1} parent=23 // loop_exit
          _
        %v172 = vld [vmem:[#allocation2] sm:$0xff]
        %v173 = vld [vmem:[#allocation6] sm:$0xff]
        %v174 = vadd.f32 %v172, %v173
        %175 = vst [vmem:[%s134] sm:$0xff] %v174
        %s176 = sand.u32 %s70, 1
        %s177 = scalar_lea.sflag [#allocation8], %s176
        %s178 = sand.u32 %s70, 1
        %s179 = smul.addr %s178, 8
        %s180 = scalar_lea.vmem [#allocation9], %s179
        // Predicated region
        $region47: #{tpu_custom_call.1} parent=23 // pred_check
          %p181 = pneg %p80
        $region48: #{tpu_custom_call.1} parent=23 // pred_check_branch
          %183 = sbr.rel (%p181) target = $region50
        $region49: #{tpu_custom_call.1} parent=23 // pred_region
          %s185 = ssub.s32 128, 128
          %186 = vsyncadd %s177, %s185
          %s187 = sadd.s32 %s27, %s26
          %s188 = smul.addr %s187, 128
          %s189 = scalar_lea.hbm %s3, %s188
          %s191 = sshll.u32 %s180, 4
          %s192 = int_to_ptr.vmem [resolvable:$true] %s191
          %194 = dma.vmem_to_hbm [thread:$0]  %s192, 128, %s189, %s177
        $region50: #{tpu_custom_call.1} parent=23 // pred_fallthru
          _
      $region24: #{tpu_custom_call.1} parent=5 // pred_fallthru
        _
      %p195 = scmp.le.s32.totalorder 2, %s17
      // Predicated region
      $region51: #{tpu_custom_call.1} parent=5 // pred_check
        %p196 = pneg %p195
      $region52: #{tpu_custom_call.1} parent=5 // pred_check_branch
        %198 = sbr.rel (%p196) target = $region54
      $region53: #{tpu_custom_call.1} parent=5 // pred_region
        %s199 = ssub.s32 %s17, 2
        // Predicated region
        $region55: #{tpu_custom_call.1} parent=53 // pred_check
          %p200 = pneg %p86
        $region56: #{tpu_custom_call.1} parent=53 // pred_check_branch
          %202 = sbr.rel (%p200) target = $region58
        $region57: #{tpu_custom_call.1} parent=53 // pred_region
          %s203 = sand.u32 %s71, 1
          %s204 = scalar_lea.sflag [#allocation8], %s203
          %s205 = sand.u32 %s71, 1
          %s206 = smul.addr %s205, 8
          %s207 = scalar_lea.vmem [#allocation9], %s206
          %208 = dma.done %s204, 128
        $region58: #{tpu_custom_call.1} parent=53 // pred_fallthru
          _
      $region54: #{tpu_custom_call.1} parent=5 // pred_fallthru
        _
    $region6: #{tpu_custom_call.1} parent=1 // loop_footer
      %s21 = sadd.s32 1, %s17
    $region7: #{tpu_custom_call.1} parent=1 // loop_footer_branch
      %16 = sbr.rel target = $region3
    $region8: #{tpu_custom_call.1} parent=1 // loop_exit
      _
    %209 = vsyncpa [#allocation7], 1
    %s210 = scalar_lea.sflag [#allocation7], 1
    %211 = vsyncpa %s210, 1
    %212 = vsyncpa [#allocation8], 1
    %s213 = scalar_lea.sflag [#allocation8], 1
    %214 = vsyncpa %s213, 1
  %215 = vsyncmov [#allocation3]
  %s216 = vpop.sfrf %215
  %p217 = scmp.eq.s32.totalorder %s216, 0
  %p218 = pneg %p217
  %220 = shalt.err (%p218)

</llo_original>
